<compile_context>
chip_gen: v6e
topology: v6e:2x2x1
jax: 0.10.0
libtpu: 0.0.40
codegen_flags: <defaults>
</compile_context>

<pallas_src>
import jax
import jax.numpy as jnp
from jax.experimental import pallas as pl
from jax.experimental.pallas import tpu as pltpu

LANE = 128      # padded contraction / hidden / output lane dims
SUBLANE = 8


def _round_up(a, m):
    return (a + m - 1) // m * m


def _sigmoid(z):
    # sigmoid via EUP exp + approximate reciprocal (cheaper than an exact divide,
    # error ~2^-12 which is far below the tolerance of this model).
    return pl.reciprocal(1.0 + jnp.exp(-z), approx=True)


def make_ann_kernel(d_hid):
    """Build the kernel body for a fixed (static) hidden width."""

    def ann_kernel(x_ref, w1_ref, b1_ref, w2_ref, b2_ref, out_ref):
        # fc1 on the MXU: [tn, 128] @ [128, 128] (zero-padded), f32 accumulation.
        h = jnp.dot(x_ref[...], w1_ref[...], preferred_element_type=jnp.float32)
        h = _sigmoid(h + b1_ref[...])                      # [tn, 128]; lanes >= d_hid unused

        # fc2 on the VPU: hidden dim is tiny (2), so expand the matmul as
        # broadcasted multiply-adds over a static Python loop.
        o = b2_ref[...]                                    # [1, 128] broadcast
        for j in range(d_hid):
            o = o + h[:, j:j + 1] * w2_ref[j:j + 1, :]     # [tn, 128] lane-dense
        out_ref[...] = _sigmoid(o)

    return ann_kernel


def ann_forward(x, w1, b1, w2, b2, *, row_tile=512):
    """x: [N, dim_input]; w1: [dim_input, dim_hidden]; b1: [1, dim_hidden];
    w2: [dim_hidden, n_classes]; b2: [1, n_classes]  ->  [N, n_classes]."""
    n, k = x.shape
    d_hid = w1.shape[1]
    d_out = w2.shape[1]
    assert k <= LANE and d_hid <= LANE and d_out <= LANE

    # Pad to clean (8, 128) vreg tiles: K -> 128, hidden/output -> 128 lanes,
    # rows -> a multiple of the row tile. Zero padding does not change the math.
    tn = row_tile if n >= row_tile else _round_up(n, SUBLANE)
    n_pad = _round_up(n, tn)

    f32 = jnp.float32
    xp  = jnp.pad(x.astype(f32),  ((0, n_pad - n), (0, LANE - k)))
    w1p = jnp.pad(w1.astype(f32), ((0, LANE - k), (0, LANE - d_hid)))
    b1p = jnp.pad(b1.astype(f32), ((0, 0), (0, LANE - d_hid)))
    w2p = jnp.pad(w2.astype(f32), ((0, 0), (0, LANE - d_out)))
    b2p = jnp.pad(b2.astype(f32), ((0, 0), (0, LANE - d_out)))

    vmem = pltpu.MemorySpace.VMEM
    out_pad = pl.pallas_call(
        make_ann_kernel(d_hid),
        out_shape=jax.ShapeDtypeStruct((n_pad, LANE), f32),
        grid=(n_pad // tn,),
        in_specs=[
            # x tiled over rows; weights / biases are VMEM-resident across steps.
            pl.BlockSpec((tn, LANE),    lambda i: (i, 0), memory_space=vmem),
            pl.BlockSpec((LANE, LANE),  lambda i: (0, 0), memory_space=vmem),
            pl.BlockSpec((1, LANE),     lambda i: (0, 0), memory_space=vmem),
            pl.BlockSpec((d_hid, LANE), lambda i: (0, 0), memory_space=vmem),
            pl.BlockSpec((1, LANE),     lambda i: (0, 0), memory_space=vmem),
        ],
        out_specs=pl.BlockSpec((tn, LANE), lambda i: (i, 0), memory_space=vmem),
        compiler_params=pltpu.CompilerParams(
            dimension_semantics=("parallel",)),
        cost_estimate=pl.CostEstimate(
            flops=2 * n * (k * d_hid + d_hid * d_out),
            transcendentals=n * (d_hid + d_out),
            bytes_accessed=4 * (n * k + n * d_out + k * d_hid
                                + d_hid * d_out + d_hid + d_out),
        ),
    )(xp, w1p, b1p, w2p, b2p)

    # Strip row / lane padding back to the logical [N, n_classes] result.
    return out_pad[:n, :d_out]


def init_params(key, dim_input, dim_hidden, dim_output):
    # Deterministic init mimicking torch.nn.Linear's uniform(-1/sqrt(fan_in), +..).
    k1, k2, k3, k4 = jax.random.split(key, 4)
    lim1 = 1.0 / jnp.sqrt(dim_input)
    lim2 = 1.0 / jnp.sqrt(dim_hidden)
    w1 = jax.random.uniform(k1, (dim_input, dim_hidden), jnp.float32, -lim1, lim1)
    b1 = jax.random.uniform(k2, (1, dim_hidden), jnp.float32, -lim1, lim1)
    w2 = jax.random.uniform(k3, (dim_hidden, dim_output), jnp.float32, -lim2, lim2)
    b2 = jax.random.uniform(k4, (1, dim_output), jnp.float32, -lim2, lim2)
    return w1, b1, w2, b2


if __name__ == "__main__":
    # Module config from the PyTorch script: ANN(n_time=100, dim_hidden=2, n_classes=2)
    n_time, dim_hidden, n_classes = 100, 2, 2
    n_data = 100
    train_size = int(round(0.8 * n_data))
    n_test = n_data - train_size  # 20 test rows, matching timeseries[train_size:, :]

    key = jax.random.PRNGKey(0)
    k_x, k_p = jax.random.split(key)

    # Reference script uses zeros; random inputs give a meaningful numeric check.
    x = jax.random.normal(k_x, (n_test, n_time), dtype=jnp.float32)
    w1, b1, w2, b2 = init_params(k_p, n_time, dim_hidden, n_classes)

    class_probs = ann_forward(x, w1, b1, w2, b2)
    jax.block_until_ready(class_probs)

    # Reference check in plain JAX (same math, exact sigmoid).
    ref = jax.nn.sigmoid(jax.nn.sigmoid(x @ w1 + b1) @ w2 + b2)
    assert class_probs.shape == (n_test, n_classes)
    # Slightly looser tolerance: the kernel sigmoid uses the EUP approximate reciprocal.
    assert jnp.allclose(class_probs, ref, atol=2e-3, rtol=2e-3), float(
        jnp.max(jnp.abs(class_probs - ref)))

    print("KERNEL_OK")
</pallas_src>

<mosaic_0001>
module attributes {stable_mosaic.version = 11 : i64} {
  func.func @ann_kernel(%arg0: i32, %arg1: memref<24x128xf32, #tpu.memory_space<vmem>>, %arg2: memref<128x128xf32, #tpu.memory_space<vmem>>, %arg3: memref<1x128xf32, #tpu.memory_space<vmem>>, %arg4: memref<2x128xf32, #tpu.memory_space<vmem>>, %arg5: memref<1x128xf32, #tpu.memory_space<vmem>>, %arg6: memref<24x128xf32, #tpu.memory_space<vmem>>) attributes {dimension_semantics = [#tpu.dimension_semantics<parallel>], iteration_bounds = array<i64: 1>, scalar_prefetch = 0 : i64, scratch_operands = 0 : i64, tpu.core_type = #tpu.core_type<tc>, window_params = [{transform_indices = @transform_0, window_bounds = array<i64: 24, 128>}, {pipeline_mode = #tpu.pipeline_mode<synchronous>, transform_indices = @transform_1, window_bounds = array<i64: 128, 128>}, {pipeline_mode = #tpu.pipeline_mode<synchronous>, transform_indices = @transform_2, window_bounds = array<i64: 1, 128>}, {pipeline_mode = #tpu.pipeline_mode<synchronous>, transform_indices = @transform_3, window_bounds = array<i64: 2, 128>}, {pipeline_mode = #tpu.pipeline_mode<synchronous>, transform_indices = @transform_4, window_bounds = array<i64: 1, 128>}, {transform_indices = @transform_5, window_bounds = array<i64: 24, 128>}]} {
    %c0 = arith.constant 0 : index
    %c0_0 = arith.constant 0 : index
    %0 = vector.load %arg1[%c0, %c0_0] : memref<24x128xf32, #tpu.memory_space<vmem>>, vector<24x128xf32>
    %c0_1 = arith.constant 0 : index
    %c0_2 = arith.constant 0 : index
    %1 = vector.load %arg2[%c0_1, %c0_2] : memref<128x128xf32, #tpu.memory_space<vmem>>, vector<128x128xf32>
    %cst = arith.constant dense<0.000000e+00> : vector<24x128xf32>
    %2 = tpu.matmul %0, %1, %cst {dimension_numbers = #tpu.dot_dimension_numbers<[1], [0], [0], [1], [0, 0, 1, 1], [], []>} : vector<24x128xf32>, vector<128x128xf32>, vector<24x128xf32> -> vector<24x128xf32>
    %c0_3 = arith.constant 0 : index
    %c0_4 = arith.constant 0 : index
    %3 = vector.load %arg3[%c0_3, %c0_4] : memref<1x128xf32, #tpu.memory_space<vmem>>, vector<1x128xf32>
    %4 = vector.broadcast %3 : vector<1x128xf32> to vector<24x128xf32>
    %5 = arith.addf %2, %4 : vector<24x128xf32>
    %cst_5 = arith.constant 0.000000e+00 : f32
    %6 = vector.broadcast %cst_5 : f32 to vector<24x128xf32>
    %7 = arith.subf %6, %5 : vector<24x128xf32>
    %8 = math.exp %7 : vector<24x128xf32>
    %cst_6 = arith.constant 1.000000e+00 : f32
    %9 = vector.broadcast %cst_6 : f32 to vector<24x128xf32>
    %10 = arith.addf %9, %8 : vector<24x128xf32>
    %11 = tpu.reciprocal %10 {approx = true} : vector<24x128xf32> -> vector<24x128xf32>
    %c0_7 = arith.constant 0 : index
    %c0_8 = arith.constant 0 : index
    %12 = vector.load %arg5[%c0_7, %c0_8] : memref<1x128xf32, #tpu.memory_space<vmem>>, vector<1x128xf32>
    %13 = vector.extract_strided_slice %11 {offsets = [0, 0], sizes = [24, 1], strides = [1, 1]} : vector<24x128xf32> to vector<24x1xf32>
    %c0_9 = arith.constant 0 : index
    %c0_10 = arith.constant 0 : index
    %14 = vector.load %arg4[%c0_9, %c0_10] : memref<2x128xf32, #tpu.memory_space<vmem>>, vector<1x128xf32>
    %15 = vector.broadcast %13 : vector<24x1xf32> to vector<24x128xf32>
    %16 = vector.broadcast %14 : vector<1x128xf32> to vector<24x128xf32>
    %17 = arith.mulf %15, %16 : vector<24x128xf32>
    %18 = vector.broadcast %12 : vector<1x128xf32> to vector<24x128xf32>
    %19 = arith.addf %18, %17 : vector<24x128xf32>
    %20 = vector.extract_strided_slice %11 {offsets = [0, 1], sizes = [24, 1], strides = [1, 1]} : vector<24x128xf32> to vector<24x1xf32>
    %c1 = arith.constant 1 : index
    %c0_11 = arith.constant 0 : index
    %21 = vector.load %arg4[%c1, %c0_11] : memref<2x128xf32, #tpu.memory_space<vmem>>, vector<1x128xf32>
    %22 = vector.broadcast %20 : vector<24x1xf32> to vector<24x128xf32>
    %23 = vector.broadcast %21 : vector<1x128xf32> to vector<24x128xf32>
    %24 = arith.mulf %22, %23 : vector<24x128xf32>
    %25 = arith.addf %19, %24 : vector<24x128xf32>
    %cst_12 = arith.constant 0.000000e+00 : f32
    %26 = vector.broadcast %cst_12 : f32 to vector<24x128xf32>
    %27 = arith.subf %26, %25 : vector<24x128xf32>
    %28 = math.exp %27 : vector<24x128xf32>
    %cst_13 = arith.constant 1.000000e+00 : f32
    %29 = vector.broadcast %cst_13 : f32 to vector<24x128xf32>
    %30 = arith.addf %29, %28 : vector<24x128xf32>
    %31 = tpu.reciprocal %30 {approx = true} : vector<24x128xf32> -> vector<24x128xf32>
    %c0_14 = arith.constant 0 : index
    %c0_15 = arith.constant 0 : index
    %32 = vector.load %arg6[%c0_14, %c0_15] : memref<24x128xf32, #tpu.memory_space<vmem>>, vector<24x128xf32>
    tpu.vector_store %arg6[%c0_14, %c0_15], %31 {strides = array<i32>} : memref<24x128xf32, #tpu.memory_space<vmem>>, vector<24x128xf32>,
    return
  }
  func.func @transform_0(%arg0: i32) -> (i32, i32) {
    %c0_i32 = arith.constant 0 : i32
    %c0_i32_0 = arith.constant 0 : i32
    return %arg0, %c0_i32 : i32, i32
  }
  func.func @transform_1(%arg0: i32) -> (i32, i32) {
    %c0_i32 = arith.constant 0 : i32
    %c0_i32_0 = arith.constant 0 : i32
    %c0_i32_1 = arith.constant 0 : i32
    return %c0_i32, %c0_i32_0 : i32, i32
  }
  func.func @transform_2(%arg0: i32) -> (i32, i32) {
    %c0_i32 = arith.constant 0 : i32
    %c0_i32_0 = arith.constant 0 : i32
    %c0_i32_1 = arith.constant 0 : i32
    return %c0_i32, %c0_i32_0 : i32, i32
  }
  func.func @transform_3(%arg0: i32) -> (i32, i32) {
    %c0_i32 = arith.constant 0 : i32
    %c0_i32_0 = arith.constant 0 : i32
    %c0_i32_1 = arith.constant 0 : i32
    return %c0_i32, %c0_i32_0 : i32, i32
  }
  func.func @transform_4(%arg0: i32) -> (i32, i32) {
    %c0_i32 = arith.constant 0 : i32
    %c0_i32_0 = arith.constant 0 : i32
    %c0_i32_1 = arith.constant 0 : i32
    return %c0_i32, %c0_i32_0 : i32, i32
  }
  func.func @transform_5(%arg0: i32) -> (i32, i32) {
    %c0_i32 = arith.constant 0 : i32
    %c0_i32_0 = arith.constant 0 : i32
    return %arg0, %c0_i32 : i32, i32
  }
}

</mosaic_0001>

<llo_original>
// kernel: tpu_custom_call.1
$region0: #{tpu_custom_call.1}
  #allocation0 [shape = 'u32[]', space=smem, size = 0x4, offset = 0x4, fixed_abs, tag = 'smem constant byte address 0x4 - core index']
  #allocation1 [shape = 'u32[144,128]{1,0:T(1,128)}', space=vmem, size = 0x12000, scoped, tag = 'internal scratch']
  %s0 = inlined_call_operand.hbm [shape: f32[24,128], index: 0, kind: input, shape index: {}]
  %s1 = inlined_call_operand.hbm [shape: f32[128,128], index: 1, kind: input, shape index: {}]
  %s2 = inlined_call_operand.vmem [shape: f32[1,128], index: 2, kind: input, shape index: {}]
  %s3 = inlined_call_operand.vmem [shape: f32[2,128], index: 3, kind: input, shape index: {}]
  %s4 = inlined_call_operand.vmem [shape: f32[1,128], index: 4, kind: input, shape index: {}]
  %s5 = inlined_call_operand.hbm [shape: f32[24,128], index: 5, kind: output, shape index: {}]
  %s6 = sld [smem:[#allocation0]]
  $region38: #{tpu_custom_call.1} parent=0
    _
  %s8 = ssub.s32 1, %s6
  %s9 = scalar_select 0, %s8, %s6
  $region1: #{tpu_custom_call.1} parent=0
    #allocation2 [shape = 'u8[12288]{0}', space=vmem, size = 0x3000, scoped, tag = 'input window, operand 0, single buffered']
    #allocation3 [shape = 's32[1]{0}', space=sflag, size = 0x4, scoped, tag = 'scoped memory for tpu_custom_call.1']
    #allocation4 [shape = 's32[1]{0}', space=sflag, size = 0x4, scoped, tag = 'scoped memory for tpu_custom_call.1']
    #allocation5 [shape = 'u8[65536]{0}', space=vmem, size = 0x10000, scoped, tag = 'input window, operand 1, single buffered']
    #allocation6 [shape = 's32[1]{0}', space=sflag, size = 0x4, scoped, tag = 'scoped memory for tpu_custom_call.1']
    #allocation7 [shape = 'u8[12288]{0}', space=vmem, size = 0x3000, scoped, tag = 'output window, operand 0, single buffered']
    %10 = vsyncpa [#allocation3], 0
    %11 = vsyncpa [#allocation6], 0
    %12 = vsyncpa [#allocation4], 0
    // Predicated region
    $region2: #{tpu_custom_call.1} parent=1 // pred_check
      _
    $region3: #{tpu_custom_call.1} parent=1 // pred_check_branch
      %14 = sbr.rel (0) target = $region5
    $region4: #{tpu_custom_call.1} parent=1 // pred_region
      %s16 = ssub.s32 384, 384
      %17 = vsyncadd [#allocation3], %s16
      %s18 = sshll.u32 [#allocation2], 4
      %s19 = int_to_ptr.vmem [resolvable:$true] %s18
      %24 = dma.hbm_to_vmem [thread:$0]  %s0, 384, %s19, [#allocation3], 128, 128, 8
    $region5: #{tpu_custom_call.1} parent=1 // pred_fallthru
      _
    // Predicated region
    $region6: #{tpu_custom_call.1} parent=1 // pred_check
      _
    $region7: #{tpu_custom_call.1} parent=1 // pred_check_branch
      %26 = sbr.rel (0) target = $region9
    $region8: #{tpu_custom_call.1} parent=1 // pred_region
      %s28 = ssub.s32 2048, 2048
      %29 = vsyncadd [#allocation6], %s28
      %s30 = sshll.u32 [#allocation5], 4
      %s31 = int_to_ptr.vmem [resolvable:$true] %s30
      %36 = dma.hbm_to_vmem [thread:$0]  %s1, 2048, %s31, [#allocation6], 128, 128, 8
    $region9: #{tpu_custom_call.1} parent=1 // pred_fallthru
      _
    // Predicated region
    $region10: #{tpu_custom_call.1} parent=1 // pred_check
      _
    $region11: #{tpu_custom_call.1} parent=1 // pred_check_branch
      %38 = sbr.rel (0) target = $region13
    $region12: #{tpu_custom_call.1} parent=1 // pred_region
      _
    $region13: #{tpu_custom_call.1} parent=1 // pred_fallthru
      _
    // Predicated region
    $region14: #{tpu_custom_call.1} parent=1 // pred_check
      _
    $region15: #{tpu_custom_call.1} parent=1 // pred_check_branch
      %40 = sbr.rel (0) target = $region17
    $region16: #{tpu_custom_call.1} parent=1 // pred_region
      _
    $region17: #{tpu_custom_call.1} parent=1 // pred_fallthru
      _
    // Predicated region
    $region18: #{tpu_custom_call.1} parent=1 // pred_check
      _
    $region19: #{tpu_custom_call.1} parent=1 // pred_check_branch
      %42 = sbr.rel (0) target = $region21
    $region20: #{tpu_custom_call.1} parent=1 // pred_region
      _
    $region21: #{tpu_custom_call.1} parent=1 // pred_fallthru
      _
    // Predicated region
    $region22: #{tpu_custom_call.1} parent=1 // pred_check
      _
    $region23: #{tpu_custom_call.1} parent=1 // pred_check_branch
      %44 = sbr.rel (0) target = $region25
    $region24: #{tpu_custom_call.1} parent=1 // pred_region
      %45 = dma.done [#allocation3], 384
    $region25: #{tpu_custom_call.1} parent=1 // pred_fallthru
      _
    // Predicated region
    $region26: #{tpu_custom_call.1} parent=1 // pred_check
      _
    $region27: #{tpu_custom_call.1} parent=1 // pred_check_branch
      %47 = sbr.rel (0) target = $region29
    $region28: #{tpu_custom_call.1} parent=1 // pred_region
      %48 = dma.done [#allocation6], 2048
    $region29: #{tpu_custom_call.1} parent=1 // pred_fallthru
      _
    %v49 = vld [vmem:[#allocation2] sm:$0xff]
    %v50 = vld [vmem:[#allocation2 + $0x8] sm:$0xff]
    %v51 = vld [vmem:[#allocation2 + $0x10] sm:$0xff]
    %v52 = vld [vmem:[#allocation5] sm:$0xff]
    %v53 = vld [vmem:[#allocation5 + $0x8] sm:$0xff]
    %v54 = vld [vmem:[#allocation5 + $0x10] sm:$0xff]
    %v55 = vld [vmem:[#allocation5 + $0x18] sm:$0xff]
    %v56 = vld [vmem:[#allocation5 + $0x20] sm:$0xff]
    %v57 = vld [vmem:[#allocation5 + $0x28] sm:$0xff]
    %v58 = vld [vmem:[#allocation5 + $0x30] sm:$0xff]
    %v59 = vld [vmem:[#allocation5 + $0x38] sm:$0xff]
    %v60 = vld [vmem:[#allocation5 + $0x40] sm:$0xff]
    %v61 = vld [vmem:[#allocation5 + $0x48] sm:$0xff]
    %v62 = vld [vmem:[#allocation5 + $0x50] sm:$0xff]
    %v63 = vld [vmem:[#allocation5 + $0x58] sm:$0xff]
    %v64 = vld [vmem:[#allocation5 + $0x60] sm:$0xff]
    %v65 = vld [vmem:[#allocation5 + $0x68] sm:$0xff]
    %v66 = vld [vmem:[#allocation5 + $0x70] sm:$0xff]
    %v67 = vld [vmem:[#allocation5 + $0x78] sm:$0xff]
    %v68 = vld [vmem:[%s2] sm:$0x1]
    %v70 = vlaneseq
    %v71 = vshrl.u32 %v70, 7
    %v72 = vsub.s32 0, %v71
    %v73 = vrot.slane %v68, %v72
    %75 = vmatprep.subr.mxu0 0.0
    %76 = vmatpush1.msra.mxu0 %v67
    %77 = vmatprep.subr.mxu0 0.0
    %78 = vmatpush1.msra.mxu0 %v66
    %79 = vmatprep.subr.mxu0 0.0
    %80 = vmatpush1.msra.mxu0 %v65
    %81 = vmatprep.subr.mxu0 0.0
    %82 = vmatpush1.msra.mxu0 %v64
    %83 = vmatprep.subr.mxu0 0.0
    %84 = vmatpush1.msra.mxu0 %v63
    %85 = vmatprep.subr.mxu0 0.0
    %86 = vmatpush1.msra.mxu0 %v62
    %87 = vmatprep.subr.mxu0 0.0
    %88 = vmatpush1.msra.mxu0 %v61
    %89 = vmatprep.subr.mxu0 0.0
    %90 = vmatpush1.msra.mxu0 %v60
    %91 = vmatprep.subr.mxu0 0.0
    %92 = vmatpush1.msra.mxu0 %v59
    %93 = vmatprep.subr.mxu0 0.0
    %94 = vmatpush1.msra.mxu0 %v58
    %95 = vmatprep.subr.mxu0 0.0
    %96 = vmatpush1.msra.mxu0 %v57
    %97 = vmatprep.subr.mxu0 0.0
    %98 = vmatpush1.msra.mxu0 %v56
    %99 = vmatprep.subr.mxu0 0.0
    %100 = vmatpush1.msra.mxu0 %v55
    %101 = vmatprep.subr.mxu0 0.0
    %102 = vmatpush1.msra.mxu0 %v54
    %103 = vmatprep.subr.mxu0 0.0
    %104 = vmatpush1.msra.mxu0 %v53
    %105 = vmatprep.subr.mxu0 0.0
    %106 = vmatpush1.msra.mxu0 %v52
    %107 = vmatprep.subr.mxu0 0.0
    %108 = vmatpush2.msra.mxu0 0.0
    %109 = vmatprep.subr.mxu0 0.0
    %110 = vmatpush2.msra.mxu0 0.0
    %111 = vmatprep.subr.mxu0 0.0
    %112 = vmatpush2.msra.mxu0 0.0
    %113 = vmatprep.subr.mxu0 0.0
    %114 = vmatpush2.msra.mxu0 0.0
    %115 = vmatprep.subr.mxu0 0.0
    %116 = vmatpush2.msra.mxu0 0.0
    %117 = vmatprep.subr.mxu0 0.0
    %118 = vmatpush2.msra.mxu0 0.0
    %119 = vmatprep.subr.mxu0 0.0
    %120 = vmatpush2.msra.mxu0 0.0
    %121 = vmatprep.subr.mxu0 0.0
    %122 = vmatpush2.msra.mxu0 0.0
    %123 = vmatprep.subr.mxu0 0.0
    %124 = vmatpush2.msra.mxu0 0.0
    %125 = vmatprep.subr.mxu0 0.0
    %126 = vmatpush2.msra.mxu0 0.0
    %127 = vmatprep.subr.mxu0 0.0
    %128 = vmatpush2.msra.mxu0 0.0
    %129 = vmatprep.subr.mxu0 0.0
    %130 = vmatpush2.msra.mxu0 0.0
    %131 = vmatprep.subr.mxu0 0.0
    %132 = vmatpush2.msra.mxu0 0.0
    %133 = vmatprep.subr.mxu0 0.0
    %134 = vmatpush2.msra.mxu0 0.0
    %135 = vmatprep.subr.mxu0 0.0
    %136 = vmatpush2.msra.mxu0 0.0
    %137 = vmatprep.subr.mxu0 0.0
    %138 = vmatpush2.msra.mxu0 0.0
    %139 = vmatprep.mubr.f32.mxu0 0.0
    %140 = vmatmul.mubr.f32.gmra.mxu0 %v49
    %v141 = vpop.f32.mrf.mxu0
    %v142 = vadd.f32 %v73, %v141
    %v143 = vpop.f32.mrf.mxu0
    %144 = vmatprep.mubr.f32.mxu0 0.0
    %145 = vmatmul.mubr.f32.gmra.mxu0 %v50
    %v146 = vpop.f32.mrf.mxu0
    %v147 = vadd.f32 %v73, %v146
    %v148 = vpop.f32.mrf.mxu0
    %149 = vmatprep.mubr.f32.mxu0 0.0
    %150 = vmatmul.mubr.f32.gmra.mxu0 %v51
    %v151 = vpop.f32.mrf.mxu0
    %v152 = vadd.f32 %v73, %v151
    %v153 = vpop.f32.mrf.mxu0
    %154 = vdwg.mxu0
    %v155 = vsub.f32 0.0, %v142
    %v156 = vsub.f32 0.0, %v147
    %v157 = vsub.f32 0.0, %v152
    %v158 = vmul.f32 %v155, 1.442695
    %v159 = vpow.pop %v158
    %v160 = vmul.f32 %v156, 1.442695
    %v161 = vpow.pop %v160
    %v162 = vmul.f32 %v157, 1.442695
    %v163 = vpow.pop %v162
    %v164 = vadd.f32 %v159, 1.0
    %v165 = vadd.f32 %v161, 1.0
    %v166 = vadd.f32 %v163, 1.0
    %v167 = vrcp.pop %v164
    %v168 = vrcp.pop %v165
    %v169 = vrcp.pop %v166
    %v170 = vld [vmem:[%s4] sm:$0x1]
    %v171 = vld [vmem:[%s3] sm:$0x1]
    %173 = vset.pattern.permute.xlu0 0
    %174 = vperm.xlu0 %173, %v167
    %v175 = vpop.permute.xlu0 %174
    %178 = vset.pattern.permute.xlu0 0
    %179 = vperm.xlu0 %178, %v168
    %v180 = vpop.permute.xlu0 %179
    %183 = vset.pattern.permute.xlu0 0
    %184 = vperm.xlu0 %183, %v169
    %v185 = vpop.permute.xlu0 %184
    %v187 = vlaneseq
    %v188 = vshrl.u32 %v187, 7
    %v189 = vsub.s32 0, %v188
    %v190 = vrot.slane %v171, %v189
    %v191 = vmul.f32 %v175, %v190
    %v192 = vmul.f32 %v180, %v190
    %v193 = vmul.f32 %v185, %v190
    %v195 = vlaneseq
    %v196 = vshrl.u32 %v195, 7
    %v197 = vsub.s32 0, %v196
    %v198 = vrot.slane %v170, %v197
    %v200 = vadd.f32 %v198, %v191
    %v201 = vadd.f32 %v198, %v192
    %v202 = vadd.f32 %v198, %v193
    %v203 = vld [vmem:[%s3 + $0x1] sm:$0x1]
    %204 = vset.pattern.permute.xlu0 1
    %205 = vperm.xlu0 %204, %v167
    %v206 = vpop.permute.xlu0 %205
    %208 = vset.pattern.permute.xlu0 1
    %209 = vperm.xlu0 %208, %v168
    %v210 = vpop.permute.xlu0 %209
    %212 = vset.pattern.permute.xlu0 1
    %213 = vperm.xlu0 %212, %v169
    %v214 = vpop.permute.xlu0 %213
    %v216 = vlaneseq
    %v217 = vshrl.u32 %v216, 7
    %v218 = vsub.s32 0, %v217
    %v219 = vrot.slane %v203, %v218
    %v220 = vmul.f32 %v206, %v219
    %v221 = vmul.f32 %v210, %v219
    %v222 = vmul.f32 %v214, %v219
    %v223 = vadd.f32 %v200, %v220
    %v224 = vadd.f32 %v201, %v221
    %v225 = vadd.f32 %v202, %v222
    %v226 = vsub.f32 0.0, %v223
    %v227 = vsub.f32 0.0, %v224
    %v228 = vsub.f32 0.0, %v225
    %v229 = vmul.f32 %v226, 1.442695
    %v230 = vpow.pop %v229
    %v231 = vmul.f32 %v227, 1.442695
    %v232 = vpow.pop %v231
    %v233 = vmul.f32 %v228, 1.442695
    %v234 = vpow.pop %v233
    %v235 = vadd.f32 %v230, 1.0
    %v236 = vadd.f32 %v232, 1.0
    %v237 = vadd.f32 %v234, 1.0
    %v238 = vrcp.pop %v235
    %v239 = vrcp.pop %v236
    %v240 = vrcp.pop %v237
    %241 = vst [vmem:[#allocation7] sm:$0xff] %v238
    %242 = vst [vmem:[#allocation7 + $0x8] sm:$0xff] %v239
    %243 = vst [vmem:[#allocation7 + $0x10] sm:$0xff] %v240
    // Predicated region
    $region30: #{tpu_custom_call.1} parent=1 // pred_check
      _
    $region31: #{tpu_custom_call.1} parent=1 // pred_check_branch
      %245 = sbr.rel (0) target = $region33
    $region32: #{tpu_custom_call.1} parent=1 // pred_region
      %s247 = ssub.s32 384, 384
      %248 = vsyncadd [#allocation4], %s247
      %s249 = sshll.u32 [#allocation7], 4
      %s250 = int_to_ptr.vmem [resolvable:$true] %s249
      %255 = dma.vmem_to_hbm [thread:$0]  %s250, 384, %s5, [#allocation4], 128, 128, 8
    $region33: #{tpu_custom_call.1} parent=1 // pred_fallthru
      _
    // Predicated region
    $region34: #{tpu_custom_call.1} parent=1 // pred_check
      _
    $region35: #{tpu_custom_call.1} parent=1 // pred_check_branch
      %257 = sbr.rel (0) target = $region37
    $region36: #{tpu_custom_call.1} parent=1 // pred_region
      %258 = dma.done [#allocation4], 384
    $region37: #{tpu_custom_call.1} parent=1 // pred_fallthru
      _
    %259 = vsyncpa [#allocation3], 1
    %260 = vsyncpa [#allocation6], 1
    %261 = vsyncpa [#allocation4], 1

</llo_original>
